<compile_context>
chip_gen: v5e
topology: v5e:2x2
jax: 0.10.0
libtpu: 0.0.40
codegen_flags: <defaults>
</compile_context>

<pallas_src>
import functools

import jax
import jax.numpy as jnp
from jax.experimental import pallas as pl
from jax.experimental.pallas import tpu as pltpu


def _mha_kernel(x_ref, wqkv_ref, bqkv_ref, wo_ref, bo_ref,
                out_ref, attn_ref,
                ctx_scratch, attn_scratch,
                *, n_heads, d_k, d_v, scale, block_b, seq_len, d_model):
    B, S, H = block_b, seq_len, n_heads

    # Flatten (B, S, D) -> (B*S, D): sublane-aligned (S=8), so this is free and
    # gives the projection matmuls B*S rows of M.
    x = x_ref[...].reshape(B * S, d_model)

    # Fused QKV projection: one MXU pass with a 3x wider N instead of three
    # narrow ones, single bias add.
    qkv = jnp.dot(x, wqkv_ref[...], preferred_element_type=jnp.float32) + bqkv_ref[...]

    # Apply the softmax scale to q (B*S, H*d_k) rather than to every (S, S)
    # score tile -> fewer VALU ops in the softmax phase.
    q_all = qkv[:, : H * d_k] * scale
    k_all = qkv[:, H * d_k: 2 * H * d_k]
    v_all = qkv[:, 2 * H * d_k:]

    for b in range(B):            # static unrolled: block_b is small
        q_b = q_all[b * S:(b + 1) * S]
        k_b = k_all[b * S:(b + 1) * S]
        v_b = v_all[b * S:(b + 1) * S]
        for h in range(H):        # static unrolled loop over heads
            qh = q_b[:, h * d_k:(h + 1) * d_k]          # (S, d_k)
            kh = k_b[:, h * d_k:(h + 1) * d_k]          # (S, d_k)
            vh = v_b[:, h * d_v:(h + 1) * d_v]          # (S, d_v)

            # scores = q @ k^T without materializing a transpose: the MXU
            # consumes k with the contraction on its second axis.
            scores = jax.lax.dot_general(
                qh, kh, (((1,), (1,)), ((), ())),
                preferred_element_type=jnp.float32)      # (S, S)

            # numerically-stable softmax; reciprocal goes to the EUP slot.
            m = jnp.max(scores, axis=-1, keepdims=True)
            e = jnp.exp(scores - m)
            attn = e * pl.reciprocal(jnp.sum(e, axis=-1, keepdims=True),
                                     approx=True)

            attn_scratch[b, h] = attn
            # head output goes straight into its lane slice of the concat slab.
            ctx_scratch[b * S:(b + 1) * S, h * d_v:(h + 1) * d_v] = jnp.dot(
                attn, vh, preferred_element_type=jnp.float32)

    # Single store of all heads' attention weights for this block.
    attn_ref[...] = attn_scratch[...]

    # Output projection over the dense (B*S, H*d_v) slab (one MXU matmul).
    out = jnp.dot(ctx_scratch[...], wo_ref[...],
                  preferred_element_type=jnp.float32) + bo_ref[...]
    out_ref[...] = out.reshape(B, S, d_model)


def _pick_block_b(bs, max_b=8):
    for cand in range(min(bs, max_b), 0, -1):
        if bs % cand == 0:
            return cand
    return 1


def multihead_attention(x, params, *, n_heads, d_k, d_v, block_b=None):
    """x: [bs, S, d_model] f32. Returns (output [bs,S,d_model], attn [bs,H,S,S])."""
    bs, S, d_model = x.shape
    scale = float(d_k) ** -0.5  # self.scale (lsa=False -> fixed constant)

    wq, bq, wk, bk, wv, bv, wo, bo = params
    # Fuse the three projections into one weight/bias (done once, outside kernel).
    wqkv = jnp.concatenate([wq, wk, wv], axis=1)   # (d_model, 3*H*d_k)
    bqkv = jnp.concatenate([bq, bk, bv], axis=1)   # (1, 3*H*d_k)

    if block_b is None:
        block_b = _pick_block_b(bs)
    grid = (bs // block_b,)

    kernel = functools.partial(
        _mha_kernel, n_heads=n_heads, d_k=d_k, d_v=d_v, scale=scale,
        block_b=block_b, seq_len=S, d_model=d_model)

    def full(shape):
        return pl.BlockSpec(shape, lambda i: (0,) * len(shape))

    out, attn = pl.pallas_call(
        kernel,
        out_shape=(
            jax.ShapeDtypeStruct((bs, S, d_model), jnp.float32),
            jax.ShapeDtypeStruct((bs, n_heads, S, S), jnp.float32),
        ),
        grid_spec=pltpu.PrefetchScalarGridSpec(
            num_scalar_prefetch=0,
            grid=grid,
            in_specs=[
                pl.BlockSpec((block_b, S, d_model), lambda i: (i, 0, 0)),  # x
                full(wqkv.shape), full(bqkv.shape),                        # fused W_QKV, b
                full(wo.shape), full(bo.shape),                            # W_O, b_O
            ],
            out_specs=[
                pl.BlockSpec((block_b, S, d_model), lambda i: (i, 0, 0)),
                pl.BlockSpec((block_b, n_heads, S, S), lambda i: (i, 0, 0, 0)),
            ],
            scratch_shapes=[
                pltpu.VMEM((block_b * S, n_heads * d_v), jnp.float32),   # head-concat slab
                pltpu.VMEM((block_b, n_heads, S, S), jnp.float32),       # attn slab
            ],
        ),
        compiler_params=pltpu.CompilerParams(
            dimension_semantics=("parallel",)),
    )(x, wqkv, bqkv, wo, bo)
    return out, attn


def _reference(x, params, *, n_heads, d_k, d_v):
    """Plain-JAX reference mirroring the PyTorch forward (eval mode)."""
    wq, bq, wk, bk, wv, bv, wo, bo = params
    bs, S, d_model = x.shape
    scale = float(d_k) ** -0.5
    q = (x @ wq + bq).reshape(bs, S, n_heads, d_k).transpose(0, 2, 1, 3)
    k = (x @ wk + bk).reshape(bs, S, n_heads, d_k).transpose(0, 2, 3, 1)
    v = (x @ wv + bv).reshape(bs, S, n_heads, d_v).transpose(0, 2, 1, 3)
    scores = jnp.einsum("bhqd,bhdk->bhqk", q, k) * scale
    attn = jax.nn.softmax(scores, axis=-1)
    o = jnp.einsum("bhqk,bhkd->bhqd", attn, v)
    o = o.transpose(0, 2, 1, 3).reshape(bs, S, n_heads * d_v)
    return o @ wo + bo, attn


if __name__ == "__main__":
    # Small shapes: bs=2, seq=8, d_model=32, n_heads=4 -> d_k = d_v = 8
    bs, S, d_model, n_heads = 2, 8, 32, 4
    d_k = d_v = d_model // n_heads

    key = jax.random.PRNGKey(0)
    keys = jax.random.split(key, 10)

    x = jax.random.normal(keys[0], (bs, S, d_model), dtype=jnp.float32)

    # Deterministic parameter init (weights stored as (in, out); biases as (1, out))
    def init_w(k, fan_in, fan_out):
        return jax.random.normal(k, (fan_in, fan_out), dtype=jnp.float32) * 0.05

    def init_b(k, fan_out):
        return jax.random.normal(k, (1, fan_out), dtype=jnp.float32) * 0.01

    params = (
        init_w(keys[1], d_model, n_heads * d_k), init_b(keys[2], n_heads * d_k),  # W_Q, b_Q
        init_w(keys[3], d_model, n_heads * d_k), init_b(keys[4], n_heads * d_k),  # W_K, b_K
        init_w(keys[5], d_model, n_heads * d_v), init_b(keys[6], n_heads * d_v),  # W_V, b_V
        init_w(keys[7], n_heads * d_v, d_model), init_b(keys[8], d_model),        # W_O, b_O
    )

    out, attn = multihead_attention(x, params, n_heads=n_heads, d_k=d_k, d_v=d_v)
    jax.block_until_ready((out, attn))

    ref_out, ref_attn = _reference(x, params, n_heads=n_heads, d_k=d_k, d_v=d_v)
    assert out.shape == (bs, S, d_model)
    assert attn.shape == (bs, n_heads, S, S)
    # Tolerance relaxed vs. exact math because the softmax normalization uses the
    # EUP approximate reciprocal (pl.reciprocal(approx=True)).
    assert jnp.allclose(out, ref_out, atol=1e-2, rtol=1e-2)
    assert jnp.allclose(attn, ref_attn, atol=1e-2, rtol=1e-2)

    print("KERNEL_OK")
</pallas_src>

<mosaic_0001>
module attributes {stable_mosaic.version = 11 : i64} {
  func.func @_mha_kernel(%arg0: i32, %arg1: memref<2x8x32xf32, #tpu.memory_space<vmem>>, %arg2: memref<32x96xf32, #tpu.memory_space<vmem>>, %arg3: memref<1x96xf32, #tpu.memory_space<vmem>>, %arg4: memref<32x32xf32, #tpu.memory_space<vmem>>, %arg5: memref<1x32xf32, #tpu.memory_space<vmem>>, %arg6: memref<2x8x32xf32, #tpu.memory_space<vmem>>, %arg7: memref<2x4x8x8xf32, #tpu.memory_space<vmem>>, %arg8: memref<16x32xf32, #tpu.memory_space<vmem>>, %arg9: memref<2x4x8x8xf32, #tpu.memory_space<vmem>>) attributes {dimension_semantics = [#tpu.dimension_semantics<parallel>], iteration_bounds = array<i64: 1>, scalar_prefetch = 0 : i64, scratch_operands = 2 : i64, tpu.core_type = #tpu.core_type<tc>, window_params = [{transform_indices = @transform_0, window_bounds = array<i64: 2, 8, 32>}, {pipeline_mode = #tpu.pipeline_mode<synchronous>, transform_indices = @transform_1, window_bounds = array<i64: 32, 96>}, {pipeline_mode = #tpu.pipeline_mode<synchronous>, transform_indices = @transform_2, window_bounds = array<i64: 1, 96>}, {pipeline_mode = #tpu.pipeline_mode<synchronous>, transform_indices = @transform_3, window_bounds = array<i64: 32, 32>}, {pipeline_mode = #tpu.pipeline_mode<synchronous>, transform_indices = @transform_4, window_bounds = array<i64: 1, 32>}, {transform_indices = @transform_5, window_bounds = array<i64: 2, 8, 32>}, {transform_indices = @transform_6, window_bounds = array<i64: 2, 4, 8, 8>}]} {
    %c0 = arith.constant 0 : index
    %c0_0 = arith.constant 0 : index
    %c0_1 = arith.constant 0 : index
    %0 = vector.load %arg1[%c0, %c0_0, %c0_1] : memref<2x8x32xf32, #tpu.memory_space<vmem>>, vector<2x8x32xf32>
    %1 = vector.shape_cast %0 : vector<2x8x32xf32> to vector<16x32xf32>
    %c0_2 = arith.constant 0 : index
    %c0_3 = arith.constant 0 : index
    %2 = vector.load %arg2[%c0_2, %c0_3] : memref<32x96xf32, #tpu.memory_space<vmem>>, vector<32x96xf32>
    %cst = arith.constant dense<0.000000e+00> : vector<16x96xf32>
    %3 = tpu.matmul %1, %2, %cst {dimension_numbers = #tpu.dot_dimension_numbers<[1], [0], [0], [1], [0, 0, 1, 1], [], []>} : vector<16x32xf32>, vector<32x96xf32>, vector<16x96xf32> -> vector<16x96xf32>
    %c0_4 = arith.constant 0 : index
    %c0_5 = arith.constant 0 : index
    %4 = vector.load %arg3[%c0_4, %c0_5] : memref<1x96xf32, #tpu.memory_space<vmem>>, vector<1x96xf32>
    %5 = vector.broadcast %4 : vector<1x96xf32> to vector<16x96xf32>
    %6 = arith.addf %3, %5 : vector<16x96xf32>
    %7 = vector.extract_strided_slice %6 {offsets = [0, 0], sizes = [16, 32], strides = [1, 1]} : vector<16x96xf32> to vector<16x32xf32>
    %cst_6 = arith.constant 0.353553385 : f32
    %8 = vector.broadcast %cst_6 : f32 to vector<16x32xf32>
    %9 = arith.mulf %7, %8 : vector<16x32xf32>
    %10 = vector.extract_strided_slice %6 {offsets = [0, 32], sizes = [16, 32], strides = [1, 1]} : vector<16x96xf32> to vector<16x32xf32>
    %11 = vector.extract_strided_slice %6 {offsets = [0, 64], sizes = [16, 32], strides = [1, 1]} : vector<16x96xf32> to vector<16x32xf32>
    %12 = vector.extract_strided_slice %9 {offsets = [0, 0], sizes = [8, 32], strides = [1, 1]} : vector<16x32xf32> to vector<8x32xf32>
    %13 = vector.extract_strided_slice %10 {offsets = [0, 0], sizes = [8, 32], strides = [1, 1]} : vector<16x32xf32> to vector<8x32xf32>
    %14 = vector.extract_strided_slice %11 {offsets = [0, 0], sizes = [8, 32], strides = [1, 1]} : vector<16x32xf32> to vector<8x32xf32>
    %15 = vector.extract_strided_slice %12 {offsets = [0, 0], sizes = [8, 8], strides = [1, 1]} : vector<8x32xf32> to vector<8x8xf32>
    %16 = vector.extract_strided_slice %13 {offsets = [0, 0], sizes = [8, 8], strides = [1, 1]} : vector<8x32xf32> to vector<8x8xf32>
    %17 = vector.extract_strided_slice %14 {offsets = [0, 0], sizes = [8, 8], strides = [1, 1]} : vector<8x32xf32> to vector<8x8xf32>
    %cst_7 = arith.constant dense<0.000000e+00> : vector<8x8xf32>
    %18 = tpu.matmul %15, %16, %cst_7 {dimension_numbers = #tpu.dot_dimension_numbers<[1], [1], [0], [0], [0, 0, 1, 0], [], []>} : vector<8x8xf32>, vector<8x8xf32>, vector<8x8xf32> -> vector<8x8xf32>
    %cst_8 = arith.constant dense<0xFF800000> : vector<8xf32>
    %19 = vector.multi_reduction <maximumf>, %18, %cst_8 [1] : vector<8x8xf32> to vector<8xf32>
    %20 = vector.shape_cast %19 : vector<8xf32> to vector<8x1xf32>
    %21 = vector.broadcast %20 : vector<8x1xf32> to vector<8x8xf32>
    %22 = arith.subf %18, %21 : vector<8x8xf32>
    %23 = math.exp %22 : vector<8x8xf32>
    %cst_9 = arith.constant dense<0.000000e+00> : vector<8xf32>
    %24 = vector.multi_reduction <add>, %23, %cst_9 [1] : vector<8x8xf32> to vector<8xf32>
    %25 = vector.shape_cast %24 : vector<8xf32> to vector<8x1xf32>
    %26 = tpu.reciprocal %25 {approx = true} : vector<8x1xf32> -> vector<8x1xf32>
    %27 = vector.broadcast %26 : vector<8x1xf32> to vector<8x8xf32>
    %28 = arith.mulf %23, %27 : vector<8x8xf32>
    %c0_10 = arith.constant 0 : index
    %c0_11 = arith.constant 0 : index
    %c0_12 = arith.constant 0 : index
    %c0_13 = arith.constant 0 : index
    %29 = vector.load %arg9[%c0_10, %c0_11, %c0_12, %c0_13] : memref<2x4x8x8xf32, #tpu.memory_space<vmem>>, vector<1x1x8x8xf32>
    %30 = vector.shape_cast %29 : vector<1x1x8x8xf32> to vector<8x8xf32>
    %31 = vector.shape_cast %28 : vector<8x8xf32> to vector<1x1x8x8xf32>
    tpu.vector_store %arg9[%c0_10, %c0_11, %c0_12, %c0_13], %31 {strides = array<i32>} : memref<2x4x8x8xf32, #tpu.memory_space<vmem>>, vector<1x1x8x8xf32>,
    %cst_14 = arith.constant dense<0.000000e+00> : vector<8x8xf32>
    %32 = tpu.matmul %28, %17, %cst_14 {dimension_numbers = #tpu.dot_dimension_numbers<[1], [0], [0], [1], [0, 0, 1, 1], [], []>} : vector<8x8xf32>, vector<8x8xf32>, vector<8x8xf32> -> vector<8x8xf32>
    %c0_15 = arith.constant 0 : index
    %c0_16 = arith.constant 0 : index
    %33 = vector.load %arg8[%c0_15, %c0_16] : memref<16x32xf32, #tpu.memory_space<vmem>>, vector<8x8xf32>
    tpu.vector_store %arg8[%c0_15, %c0_16], %32 {strides = array<i32>} : memref<16x32xf32, #tpu.memory_space<vmem>>, vector<8x8xf32>,
    %34 = vector.extract_strided_slice %12 {offsets = [0, 8], sizes = [8, 8], strides = [1, 1]} : vector<8x32xf32> to vector<8x8xf32>
    %35 = vector.extract_strided_slice %13 {offsets = [0, 8], sizes = [8, 8], strides = [1, 1]} : vector<8x32xf32> to vector<8x8xf32>
    %36 = vector.extract_strided_slice %14 {offsets = [0, 8], sizes = [8, 8], strides = [1, 1]} : vector<8x32xf32> to vector<8x8xf32>
    %cst_17 = arith.constant dense<0.000000e+00> : vector<8x8xf32>
    %37 = tpu.matmul %34, %35, %cst_17 {dimension_numbers = #tpu.dot_dimension_numbers<[1], [1], [0], [0], [0, 0, 1, 0], [], []>} : vector<8x8xf32>, vector<8x8xf32>, vector<8x8xf32> -> vector<8x8xf32>
    %cst_18 = arith.constant dense<0xFF800000> : vector<8xf32>
    %38 = vector.multi_reduction <maximumf>, %37, %cst_18 [1] : vector<8x8xf32> to vector<8xf32>
    %39 = vector.shape_cast %38 : vector<8xf32> to vector<8x1xf32>
    %40 = vector.broadcast %39 : vector<8x1xf32> to vector<8x8xf32>
    %41 = arith.subf %37, %40 : vector<8x8xf32>
    %42 = math.exp %41 : vector<8x8xf32>
    %cst_19 = arith.constant dense<0.000000e+00> : vector<8xf32>
    %43 = vector.multi_reduction <add>, %42, %cst_19 [1] : vector<8x8xf32> to vector<8xf32>
    %44 = vector.shape_cast %43 : vector<8xf32> to vector<8x1xf32>
    %45 = tpu.reciprocal %44 {approx = true} : vector<8x1xf32> -> vector<8x1xf32>
    %46 = vector.broadcast %45 : vector<8x1xf32> to vector<8x8xf32>
    %47 = arith.mulf %42, %46 : vector<8x8xf32>
    %c0_20 = arith.constant 0 : index
    %c1 = arith.constant 1 : index
    %c0_21 = arith.constant 0 : index
    %c0_22 = arith.constant 0 : index
    %48 = vector.load %arg9[%c0_20, %c1, %c0_21, %c0_22] : memref<2x4x8x8xf32, #tpu.memory_space<vmem>>, vector<1x1x8x8xf32>
    %49 = vector.shape_cast %48 : vector<1x1x8x8xf32> to vector<8x8xf32>
    %50 = vector.shape_cast %47 : vector<8x8xf32> to vector<1x1x8x8xf32>
    tpu.vector_store %arg9[%c0_20, %c1, %c0_21, %c0_22], %50 {strides = array<i32>} : memref<2x4x8x8xf32, #tpu.memory_space<vmem>>, vector<1x1x8x8xf32>,
    %cst_23 = arith.constant dense<0.000000e+00> : vector<8x8xf32>
    %51 = tpu.matmul %47, %36, %cst_23 {dimension_numbers = #tpu.dot_dimension_numbers<[1], [0], [0], [1], [0, 0, 1, 1], [], []>} : vector<8x8xf32>, vector<8x8xf32>, vector<8x8xf32> -> vector<8x8xf32>
    %c0_24 = arith.constant 0 : index
    %c8 = arith.constant 8 : index
    %52 = vector.load %arg8[%c0_24, %c8] : memref<16x32xf32, #tpu.memory_space<vmem>>, vector<8x8xf32>
    tpu.vector_store %arg8[%c0_24, %c8], %51 {strides = array<i32>} : memref<16x32xf32, #tpu.memory_space<vmem>>, vector<8x8xf32>,
    %53 = vector.extract_strided_slice %12 {offsets = [0, 16], sizes = [8, 8], strides = [1, 1]} : vector<8x32xf32> to vector<8x8xf32>
    %54 = vector.extract_strided_slice %13 {offsets = [0, 16], sizes = [8, 8], strides = [1, 1]} : vector<8x32xf32> to vector<8x8xf32>
    %55 = vector.extract_strided_slice %14 {offsets = [0, 16], sizes = [8, 8], strides = [1, 1]} : vector<8x32xf32> to vector<8x8xf32>
    %cst_25 = arith.constant dense<0.000000e+00> : vector<8x8xf32>
    %56 = tpu.matmul %53, %54, %cst_25 {dimension_numbers = #tpu.dot_dimension_numbers<[1], [1], [0], [0], [0, 0, 1, 0], [], []>} : vector<8x8xf32>, vector<8x8xf32>, vector<8x8xf32> -> vector<8x8xf32>
    %cst_26 = arith.constant dense<0xFF800000> : vector<8xf32>
    %57 = vector.multi_reduction <maximumf>, %56, %cst_26 [1] : vector<8x8xf32> to vector<8xf32>
    %58 = vector.shape_cast %57 : vector<8xf32> to vector<8x1xf32>
    %59 = vector.broadcast %58 : vector<8x1xf32> to vector<8x8xf32>
    %60 = arith.subf %56, %59 : vector<8x8xf32>
    %61 = math.exp %60 : vector<8x8xf32>
    %cst_27 = arith.constant dense<0.000000e+00> : vector<8xf32>
    %62 = vector.multi_reduction <add>, %61, %cst_27 [1] : vector<8x8xf32> to vector<8xf32>
    %63 = vector.shape_cast %62 : vector<8xf32> to vector<8x1xf32>
    %64 = tpu.reciprocal %63 {approx = true} : vector<8x1xf32> -> vector<8x1xf32>
    %65 = vector.broadcast %64 : vector<8x1xf32> to vector<8x8xf32>
    %66 = arith.mulf %61, %65 : vector<8x8xf32>
    %c0_28 = arith.constant 0 : index
    %c2 = arith.constant 2 : index
    %c0_29 = arith.constant 0 : index
    %c0_30 = arith.constant 0 : index
    %67 = vector.load %arg9[%c0_28, %c2, %c0_29, %c0_30] : memref<2x4x8x8xf32, #tpu.memory_space<vmem>>, vector<1x1x8x8xf32>
    %68 = vector.shape_cast %67 : vector<1x1x8x8xf32> to vector<8x8xf32>
    %69 = vector.shape_cast %66 : vector<8x8xf32> to vector<1x1x8x8xf32>
    tpu.vector_store %arg9[%c0_28, %c2, %c0_29, %c0_30], %69 {strides = array<i32>} : memref<2x4x8x8xf32, #tpu.memory_space<vmem>>, vector<1x1x8x8xf32>,
    %cst_31 = arith.constant dense<0.000000e+00> : vector<8x8xf32>
    %70 = tpu.matmul %66, %55, %cst_31 {dimension_numbers = #tpu.dot_dimension_numbers<[1], [0], [0], [1], [0, 0, 1, 1], [], []>} : vector<8x8xf32>, vector<8x8xf32>, vector<8x8xf32> -> vector<8x8xf32>
    %c0_32 = arith.constant 0 : index
    %c16 = arith.constant 16 : index
    %71 = vector.load %arg8[%c0_32, %c16] : memref<16x32xf32, #tpu.memory_space<vmem>>, vector<8x8xf32>
    tpu.vector_store %arg8[%c0_32, %c16], %70 {strides = array<i32>} : memref<16x32xf32, #tpu.memory_space<vmem>>, vector<8x8xf32>,
    %72 = vector.extract_strided_slice %12 {offsets = [0, 24], sizes = [8, 8], strides = [1, 1]} : vector<8x32xf32> to vector<8x8xf32>
    %73 = vector.extract_strided_slice %13 {offsets = [0, 24], sizes = [8, 8], strides = [1, 1]} : vector<8x32xf32> to vector<8x8xf32>
    %74 = vector.extract_strided_slice %14 {offsets = [0, 24], sizes = [8, 8], strides = [1, 1]} : vector<8x32xf32> to vector<8x8xf32>
    %cst_33 = arith.constant dense<0.000000e+00> : vector<8x8xf32>
    %75 = tpu.matmul %72, %73, %cst_33 {dimension_numbers = #tpu.dot_dimension_numbers<[1], [1], [0], [0], [0, 0, 1, 0], [], []>} : vector<8x8xf32>, vector<8x8xf32>, vector<8x8xf32> -> vector<8x8xf32>
    %cst_34 = arith.constant dense<0xFF800000> : vector<8xf32>
    %76 = vector.multi_reduction <maximumf>, %75, %cst_34 [1] : vector<8x8xf32> to vector<8xf32>
    %77 = vector.shape_cast %76 : vector<8xf32> to vector<8x1xf32>
    %78 = vector.broadcast %77 : vector<8x1xf32> to vector<8x8xf32>
    %79 = arith.subf %75, %78 : vector<8x8xf32>
    %80 = math.exp %79 : vector<8x8xf32>
    %cst_35 = arith.constant dense<0.000000e+00> : vector<8xf32>
    %81 = vector.multi_reduction <add>, %80, %cst_35 [1] : vector<8x8xf32> to vector<8xf32>
    %82 = vector.shape_cast %81 : vector<8xf32> to vector<8x1xf32>
    %83 = tpu.reciprocal %82 {approx = true} : vector<8x1xf32> -> vector<8x1xf32>
    %84 = vector.broadcast %83 : vector<8x1xf32> to vector<8x8xf32>
    %85 = arith.mulf %80, %84 : vector<8x8xf32>
    %c0_36 = arith.constant 0 : index
    %c3 = arith.constant 3 : index
    %c0_37 = arith.constant 0 : index
    %c0_38 = arith.constant 0 : index
    %86 = vector.load %arg9[%c0_36, %c3, %c0_37, %c0_38] : memref<2x4x8x8xf32, #tpu.memory_space<vmem>>, vector<1x1x8x8xf32>
    %87 = vector.shape_cast %86 : vector<1x1x8x8xf32> to vector<8x8xf32>
    %88 = vector.shape_cast %85 : vector<8x8xf32> to vector<1x1x8x8xf32>
    tpu.vector_store %arg9[%c0_36, %c3, %c0_37, %c0_38], %88 {strides = array<i32>} : memref<2x4x8x8xf32, #tpu.memory_space<vmem>>, vector<1x1x8x8xf32>,
    %cst_39 = arith.constant dense<0.000000e+00> : vector<8x8xf32>
    %89 = tpu.matmul %85, %74, %cst_39 {dimension_numbers = #tpu.dot_dimension_numbers<[1], [0], [0], [1], [0, 0, 1, 1], [], []>} : vector<8x8xf32>, vector<8x8xf32>, vector<8x8xf32> -> vector<8x8xf32>
    %c0_40 = arith.constant 0 : index
    %c24 = arith.constant 24 : index
    %90 = vector.load %arg8[%c0_40, %c24] : memref<16x32xf32, #tpu.memory_space<vmem>>, vector<8x8xf32>
    tpu.vector_store %arg8[%c0_40, %c24], %89 {strides = array<i32>} : memref<16x32xf32, #tpu.memory_space<vmem>>, vector<8x8xf32>,
    %91 = vector.extract_strided_slice %9 {offsets = [8, 0], sizes = [8, 32], strides = [1, 1]} : vector<16x32xf32> to vector<8x32xf32>
    %92 = vector.extract_strided_slice %10 {offsets = [8, 0], sizes = [8, 32], strides = [1, 1]} : vector<16x32xf32> to vector<8x32xf32>
    %93 = vector.extract_strided_slice %11 {offsets = [8, 0], sizes = [8, 32], strides = [1, 1]} : vector<16x32xf32> to vector<8x32xf32>
    %94 = vector.extract_strided_slice %91 {offsets = [0, 0], sizes = [8, 8], strides = [1, 1]} : vector<8x32xf32> to vector<8x8xf32>
    %95 = vector.extract_strided_slice %92 {offsets = [0, 0], sizes = [8, 8], strides = [1, 1]} : vector<8x32xf32> to vector<8x8xf32>
    %96 = vector.extract_strided_slice %93 {offsets = [0, 0], sizes = [8, 8], strides = [1, 1]} : vector<8x32xf32> to vector<8x8xf32>
    %cst_41 = arith.constant dense<0.000000e+00> : vector<8x8xf32>
    %97 = tpu.matmul %94, %95, %cst_41 {dimension_numbers = #tpu.dot_dimension_numbers<[1], [1], [0], [0], [0, 0, 1, 0], [], []>} : vector<8x8xf32>, vector<8x8xf32>, vector<8x8xf32> -> vector<8x8xf32>
    %cst_42 = arith.constant dense<0xFF800000> : vector<8xf32>
    %98 = vector.multi_reduction <maximumf>, %97, %cst_42 [1] : vector<8x8xf32> to vector<8xf32>
    %99 = vector.shape_cast %98 : vector<8xf32> to vector<8x1xf32>
    %100 = vector.broadcast %99 : vector<8x1xf32> to vector<8x8xf32>
    %101 = arith.subf %97, %100 : vector<8x8xf32>
    %102 = math.exp %101 : vector<8x8xf32>
    %cst_43 = arith.constant dense<0.000000e+00> : vector<8xf32>
    %103 = vector.multi_reduction <add>, %102, %cst_43 [1] : vector<8x8xf32> to vector<8xf32>
    %104 = vector.shape_cast %103 : vector<8xf32> to vector<8x1xf32>
    %105 = tpu.reciprocal %104 {approx = true} : vector<8x1xf32> -> vector<8x1xf32>
    %106 = vector.broadcast %105 : vector<8x1xf32> to vector<8x8xf32>
    %107 = arith.mulf %102, %106 : vector<8x8xf32>
    %c1_44 = arith.constant 1 : index
    %c0_45 = arith.constant 0 : index
    %c0_46 = arith.constant 0 : index
    %c0_47 = arith.constant 0 : index
    %108 = vector.load %arg9[%c1_44, %c0_45, %c0_46, %c0_47] : memref<2x4x8x8xf32, #tpu.memory_space<vmem>>, vector<1x1x8x8xf32>
    %109 = vector.shape_cast %108 : vector<1x1x8x8xf32> to vector<8x8xf32>
    %110 = vector.shape_cast %107 : vector<8x8xf32> to vector<1x1x8x8xf32>
    tpu.vector_store %arg9[%c1_44, %c0_45, %c0_46, %c0_47], %110 {strides = array<i32>} : memref<2x4x8x8xf32, #tpu.memory_space<vmem>>, vector<1x1x8x8xf32>,
    %cst_48 = arith.constant dense<0.000000e+00> : vector<8x8xf32>
    %111 = tpu.matmul %107, %96, %cst_48 {dimension_numbers = #tpu.dot_dimension_numbers<[1], [0], [0], [1], [0, 0, 1, 1], [], []>} : vector<8x8xf32>, vector<8x8xf32>, vector<8x8xf32> -> vector<8x8xf32>
    %c8_49 = arith.constant 8 : index
    %c0_50 = arith.constant 0 : index
    %112 = vector.load %arg8[%c8_49, %c0_50] : memref<16x32xf32, #tpu.memory_space<vmem>>, vector<8x8xf32>
    tpu.vector_store %arg8[%c8_49, %c0_50], %111 {strides = array<i32>} : memref<16x32xf32, #tpu.memory_space<vmem>>, vector<8x8xf32>,
    %113 = vector.extract_strided_slice %91 {offsets = [0, 8], sizes = [8, 8], strides = [1, 1]} : vector<8x32xf32> to vector<8x8xf32>
    %114 = vector.extract_strided_slice %92 {offsets = [0, 8], sizes = [8, 8], strides = [1, 1]} : vector<8x32xf32> to vector<8x8xf32>
    %115 = vector.extract_strided_slice %93 {offsets = [0, 8], sizes = [8, 8], strides = [1, 1]} : vector<8x32xf32> to vector<8x8xf32>
    %cst_51 = arith.constant dense<0.000000e+00> : vector<8x8xf32>
    %116 = tpu.matmul %113, %114, %cst_51 {dimension_numbers = #tpu.dot_dimension_numbers<[1], [1], [0], [0], [0, 0, 1, 0], [], []>} : vector<8x8xf32>, vector<8x8xf32>, vector<8x8xf32> -> vector<8x8xf32>
    %cst_52 = arith.constant dense<0xFF800000> : vector<8xf32>
    %117 = vector.multi_reduction <maximumf>, %116, %cst_52 [1] : vector<8x8xf32> to vector<8xf32>
    %118 = vector.shape_cast %117 : vector<8xf32> to vector<8x1xf32>
    %119 = vector.broadcast %118 : vector<8x1xf32> to vector<8x8xf32>
    %120 = arith.subf %116, %119 : vector<8x8xf32>
    %121 = math.exp %120 : vector<8x8xf32>
    %cst_53 = arith.constant dense<0.000000e+00> : vector<8xf32>
    %122 = vector.multi_reduction <add>, %121, %cst_53 [1] : vector<8x8xf32> to vector<8xf32>
    %123 = vector.shape_cast %122 : vector<8xf32> to vector<8x1xf32>
    %124 = tpu.reciprocal %123 {approx = true} : vector<8x1xf32> -> vector<8x1xf32>
    %125 = vector.broadcast %124 : vector<8x1xf32> to vector<8x8xf32>
    %126 = arith.mulf %121, %125 : vector<8x8xf32>
    %c1_54 = arith.constant 1 : index
    %c1_55 = arith.constant 1 : index
    %c0_56 = arith.constant 0 : index
    %c0_57 = arith.constant 0 : index
    %127 = vector.load %arg9[%c1_54, %c1_55, %c0_56, %c0_57] : memref<2x4x8x8xf32, #tpu.memory_space<vmem>>, vector<1x1x8x8xf32>
    %128 = vector.shape_cast %127 : vector<1x1x8x8xf32> to vector<8x8xf32>
    %129 = vector.shape_cast %126 : vector<8x8xf32> to vector<1x1x8x8xf32>
    tpu.vector_store %arg9[%c1_54, %c1_55, %c0_56, %c0_57], %129 {strides = array<i32>} : memref<2x4x8x8xf32, #tpu.memory_space<vmem>>, vector<1x1x8x8xf32>,
    %cst_58 = arith.constant dense<0.000000e+00> : vector<8x8xf32>
    %130 = tpu.matmul %126, %115, %cst_58 {dimension_numbers = #tpu.dot_dimension_numbers<[1], [0], [0], [1], [0, 0, 1, 1], [], []>} : vector<8x8xf32>, vector<8x8xf32>, vector<8x8xf32> -> vector<8x8xf32>
    %c8_59 = arith.constant 8 : index
    %c8_60 = arith.constant 8 : index
    %131 = vector.load %arg8[%c8_59, %c8_60] : memref<16x32xf32, #tpu.memory_space<vmem>>, vector<8x8xf32>
    tpu.vector_store %arg8[%c8_59, %c8_60], %130 {strides = array<i32>} : memref<16x32xf32, #tpu.memory_space<vmem>>, vector<8x8xf32>,
    %132 = vector.extract_strided_slice %91 {offsets = [0, 16], sizes = [8, 8], strides = [1, 1]} : vector<8x32xf32> to vector<8x8xf32>
    %133 = vector.extract_strided_slice %92 {offsets = [0, 16], sizes = [8, 8], strides = [1, 1]} : vector<8x32xf32> to vector<8x8xf32>
    %134 = vector.extract_strided_slice %93 {offsets = [0, 16], sizes = [8, 8], strides = [1, 1]} : vector<8x32xf32> to vector<8x8xf32>
    %cst_61 = arith.constant dense<0.000000e+00> : vector<8x8xf32>
    %135 = tpu.matmul %132, %133, %cst_61 {dimension_numbers = #tpu.dot_dimension_numbers<[1], [1], [0], [0], [0, 0, 1, 0], [], []>} : vector<8x8xf32>, vector<8x8xf32>, vector<8x8xf32> -> vector<8x8xf32>
    %cst_62 = arith.constant dense<0xFF800000> : vector<8xf32>
    %136 = vector.multi_reduction <maximumf>, %135, %cst_62 [1] : vector<8x8xf32> to vector<8xf32>
    %137 = vector.shape_cast %136 : vector<8xf32> to vector<8x1xf32>
    %138 = vector.broadcast %137 : vector<8x1xf32> to vector<8x8xf32>
    %139 = arith.subf %135, %138 : vector<8x8xf32>
    %140 = math.exp %139 : vector<8x8xf32>
    %cst_63 = arith.constant dense<0.000000e+00> : vector<8xf32>
    %141 = vector.multi_reduction <add>, %140, %cst_63 [1] : vector<8x8xf32> to vector<8xf32>
    %142 = vector.shape_cast %141 : vector<8xf32> to vector<8x1xf32>
    %143 = tpu.reciprocal %142 {approx = true} : vector<8x1xf32> -> vector<8x1xf32>
    %144 = vector.broadcast %143 : vector<8x1xf32> to vector<8x8xf32>
    %145 = arith.mulf %140, %144 : vector<8x8xf32>
    %c1_64 = arith.constant 1 : index
    %c2_65 = arith.constant 2 : index
    %c0_66 = arith.constant 0 : index
    %c0_67 = arith.constant 0 : index
    %146 = vector.load %arg9[%c1_64, %c2_65, %c0_66, %c0_67] : memref<2x4x8x8xf32, #tpu.memory_space<vmem>>, vector<1x1x8x8xf32>
    %147 = vector.shape_cast %146 : vector<1x1x8x8xf32> to vector<8x8xf32>
    %148 = vector.shape_cast %145 : vector<8x8xf32> to vector<1x1x8x8xf32>
    tpu.vector_store %arg9[%c1_64, %c2_65, %c0_66, %c0_67], %148 {strides = array<i32>} : memref<2x4x8x8xf32, #tpu.memory_space<vmem>>, vector<1x1x8x8xf32>,
    %cst_68 = arith.constant dense<0.000000e+00> : vector<8x8xf32>
    %149 = tpu.matmul %145, %134, %cst_68 {dimension_numbers = #tpu.dot_dimension_numbers<[1], [0], [0], [1], [0, 0, 1, 1], [], []>} : vector<8x8xf32>, vector<8x8xf32>, vector<8x8xf32> -> vector<8x8xf32>
    %c8_69 = arith.constant 8 : index
    %c16_70 = arith.constant 16 : index
    %150 = vector.load %arg8[%c8_69, %c16_70] : memref<16x32xf32, #tpu.memory_space<vmem>>, vector<8x8xf32>
    tpu.vector_store %arg8[%c8_69, %c16_70], %149 {strides = array<i32>} : memref<16x32xf32, #tpu.memory_space<vmem>>, vector<8x8xf32>,
    %151 = vector.extract_strided_slice %91 {offsets = [0, 24], sizes = [8, 8], strides = [1, 1]} : vector<8x32xf32> to vector<8x8xf32>
    %152 = vector.extract_strided_slice %92 {offsets = [0, 24], sizes = [8, 8], strides = [1, 1]} : vector<8x32xf32> to vector<8x8xf32>
    %153 = vector.extract_strided_slice %93 {offsets = [0, 24], sizes = [8, 8], strides = [1, 1]} : vector<8x32xf32> to vector<8x8xf32>
    %cst_71 = arith.constant dense<0.000000e+00> : vector<8x8xf32>
    %154 = tpu.matmul %151, %152, %cst_71 {dimension_numbers = #tpu.dot_dimension_numbers<[1], [1], [0], [0], [0, 0, 1, 0], [], []>} : vector<8x8xf32>, vector<8x8xf32>, vector<8x8xf32> -> vector<8x8xf32>
    %cst_72 = arith.constant dense<0xFF800000> : vector<8xf32>
    %155 = vector.multi_reduction <maximumf>, %154, %cst_72 [1] : vector<8x8xf32> to vector<8xf32>
    %156 = vector.shape_cast %155 : vector<8xf32> to vector<8x1xf32>
    %157 = vector.broadcast %156 : vector<8x1xf32> to vector<8x8xf32>
    %158 = arith.subf %154, %157 : vector<8x8xf32>
    %159 = math.exp %158 : vector<8x8xf32>
    %cst_73 = arith.constant dense<0.000000e+00> : vector<8xf32>
    %160 = vector.multi_reduction <add>, %159, %cst_73 [1] : vector<8x8xf32> to vector<8xf32>
    %161 = vector.shape_cast %160 : vector<8xf32> to vector<8x1xf32>
    %162 = tpu.reciprocal %161 {approx = true} : vector<8x1xf32> -> vector<8x1xf32>
    %163 = vector.broadcast %162 : vector<8x1xf32> to vector<8x8xf32>
    %164 = arith.mulf %159, %163 : vector<8x8xf32>
    %c1_74 = arith.constant 1 : index
    %c3_75 = arith.constant 3 : index
    %c0_76 = arith.constant 0 : index
    %c0_77 = arith.constant 0 : index
    %165 = vector.load %arg9[%c1_74, %c3_75, %c0_76, %c0_77] : memref<2x4x8x8xf32, #tpu.memory_space<vmem>>, vector<1x1x8x8xf32>
    %166 = vector.shape_cast %165 : vector<1x1x8x8xf32> to vector<8x8xf32>
    %167 = vector.shape_cast %164 : vector<8x8xf32> to vector<1x1x8x8xf32>
    tpu.vector_store %arg9[%c1_74, %c3_75, %c0_76, %c0_77], %167 {strides = array<i32>} : memref<2x4x8x8xf32, #tpu.memory_space<vmem>>, vector<1x1x8x8xf32>,
    %cst_78 = arith.constant dense<0.000000e+00> : vector<8x8xf32>
    %168 = tpu.matmul %164, %153, %cst_78 {dimension_numbers = #tpu.dot_dimension_numbers<[1], [0], [0], [1], [0, 0, 1, 1], [], []>} : vector<8x8xf32>, vector<8x8xf32>, vector<8x8xf32> -> vector<8x8xf32>
    %c8_79 = arith.constant 8 : index
    %c24_80 = arith.constant 24 : index
    %169 = vector.load %arg8[%c8_79, %c24_80] : memref<16x32xf32, #tpu.memory_space<vmem>>, vector<8x8xf32>
    tpu.vector_store %arg8[%c8_79, %c24_80], %168 {strides = array<i32>} : memref<16x32xf32, #tpu.memory_space<vmem>>, vector<8x8xf32>,
    %c0_81 = arith.constant 0 : index
    %c0_82 = arith.constant 0 : index
    %c0_83 = arith.constant 0 : index
    %c0_84 = arith.constant 0 : index
    %170 = vector.load %arg9[%c0_81, %c0_82, %c0_83, %c0_84] : memref<2x4x8x8xf32, #tpu.memory_space<vmem>>, vector<2x4x8x8xf32>
    %c0_85 = arith.constant 0 : index
    %c0_86 = arith.constant 0 : index
    %c0_87 = arith.constant 0 : index
    %c0_88 = arith.constant 0 : index
    %171 = vector.load %arg7[%c0_85, %c0_86, %c0_87, %c0_88] : memref<2x4x8x8xf32, #tpu.memory_space<vmem>>, vector<2x4x8x8xf32>
    tpu.vector_store %arg7[%c0_85, %c0_86, %c0_87, %c0_88], %170 {strides = array<i32>} : memref<2x4x8x8xf32, #tpu.memory_space<vmem>>, vector<2x4x8x8xf32>,
    %c0_89 = arith.constant 0 : index
    %c0_90 = arith.constant 0 : index
    %172 = vector.load %arg8[%c0_89, %c0_90] : memref<16x32xf32, #tpu.memory_space<vmem>>, vector<16x32xf32>
    %c0_91 = arith.constant 0 : index
    %c0_92 = arith.constant 0 : index
    %173 = vector.load %arg4[%c0_91, %c0_92] : memref<32x32xf32, #tpu.memory_space<vmem>>, vector<32x32xf32>
    %cst_93 = arith.constant dense<0.000000e+00> : vector<16x32xf32>
    %174 = tpu.matmul %172, %173, %cst_93 {dimension_numbers = #tpu.dot_dimension_numbers<[1], [0], [0], [1], [0, 0, 1, 1], [], []>} : vector<16x32xf32>, vector<32x32xf32>, vector<16x32xf32> -> vector<16x32xf32>
    %c0_94 = arith.constant 0 : index
    %c0_95 = arith.constant 0 : index
    %175 = vector.load %arg5[%c0_94, %c0_95] : memref<1x32xf32, #tpu.memory_space<vmem>>, vector<1x32xf32>
    %176 = vector.broadcast %175 : vector<1x32xf32> to vector<16x32xf32>
    %177 = arith.addf %174, %176 : vector<16x32xf32>
    %178 = vector.shape_cast %177 : vector<16x32xf32> to vector<2x8x32xf32>
    %c0_96 = arith.constant 0 : index
    %c0_97 = arith.constant 0 : index
    %c0_98 = arith.constant 0 : index
    %179 = vector.load %arg6[%c0_96, %c0_97, %c0_98] : memref<2x8x32xf32, #tpu.memory_space<vmem>>, vector<2x8x32xf32>
    tpu.vector_store %arg6[%c0_96, %c0_97, %c0_98], %178 {strides = array<i32>} : memref<2x8x32xf32, #tpu.memory_space<vmem>>, vector<2x8x32xf32>,
    return
  }
  func.func @transform_0(%arg0: i32) -> (i32, i32, i32) {
    %c0_i32 = arith.constant 0 : i32
    %c0_i32_0 = arith.constant 0 : i32
    %c0_i32_1 = arith.constant 0 : i32
    return %arg0, %c0_i32, %c0_i32_0 : i32, i32, i32
  }
  func.func @transform_1(%arg0: i32) -> (i32, i32) {
    %c0_i32 = arith.constant 0 : i32
    %c0_i32_0 = arith.constant 0 : i32
    %c0_i32_1 = arith.constant 0 : i32
    return %c0_i32, %c0_i32_0 : i32, i32
  }
  func.func @transform_2(%arg0: i32) -> (i32, i32) {
    %c0_i32 = arith.constant 0 : i32
    %c0_i32_0 = arith.constant 0 : i32
    %c0_i32_1 = arith.constant 0 : i32
    return %c0_i32, %c0_i32_0 : i32, i32
  }
  func.func @transform_3(%arg0: i32) -> (i32, i32) {
    %c0_i32 = arith.constant 0 : i32
    %c0_i32_0 = arith.constant 0 : i32
    %c0_i32_1 = arith.constant 0 : i32
    return %c0_i32, %c0_i32_0 : i32, i32
  }
  func.func @transform_4(%arg0: i32) -> (i32, i32) {
    %c0_i32 = arith.constant 0 : i32
    %c0_i32_0 = arith.constant 0 : i32
    %c0_i32_1 = arith.constant 0 : i32
    return %c0_i32, %c0_i32_0 : i32, i32
  }
  func.func @transform_5(%arg0: i32) -> (i32, i32, i32) {
    %c0_i32 = arith.constant 0 : i32
    %c0_i32_0 = arith.constant 0 : i32
    %c0_i32_1 = arith.constant 0 : i32
    return %arg0, %c0_i32, %c0_i32_0 : i32, i32, i32
  }
  func.func @transform_6(%arg0: i32) -> (i32, i32, i32, i32) {
    %c0_i32 = arith.constant 0 : i32
    %c0_i32_0 = arith.constant 0 : i32
    %c0_i32_1 = arith.constant 0 : i32
    %c0_i32_2 = arith.constant 0 : i32
    return %arg0, %c0_i32, %c0_i32_0, %c0_i32_1 : i32, i32, i32, i32
  }
}

</mosaic_0001>

<llo_original>
// kernel: tpu_custom_call.1
$region0: #{tpu_custom_call.1}
  #allocation0 [shape = 'u32[]', space=smem, size = 0x4, offset = 0x4, fixed_abs, tag = 'smem constant byte address 0x4 - core index']
  #allocation1 [shape = 'u32[72,128]{1,0:T(1,128)}', space=vmem, size = 0x9000, scoped, tag = 'internal scratch']
  #allocation2 [shape = 'f32[16,32]{1,0:T(8,128)}', space=vmem, size = 0x2000, scoped, tag = 'scratch operand']
  #allocation3 [shape = 'f32[2,4,8,8]{3,2,1,0:T(8,128)}', space=vmem, size = 0x8000, scoped, tag = 'scratch operand']
  %s0 = inlined_call_operand.hbm [shape: f32[2,8,32], index: 0, kind: input, shape index: {}]
  %s1 = inlined_call_operand.hbm [shape: f32[32,96], index: 1, kind: input, shape index: {}]
  %s2 = inlined_call_operand.vmem [shape: f32[1,96], index: 2, kind: input, shape index: {}]
  %s3 = inlined_call_operand.hbm [shape: f32[32,32], index: 3, kind: input, shape index: {}]
  %s4 = inlined_call_operand.vmem [shape: f32[1,32], index: 4, kind: input, shape index: {}]
  %s5 = inlined_call_operand.hbm [shape: f32[2,8,32], index: 5, kind: output, shape index: {0}]
  %s6 = inlined_call_operand.hbm [shape: f32[2,4,8,8], index: 6, kind: output, shape index: {1}]
  %7 = xla_tuple %s5, %s6
  %s8 = sld [smem:[#allocation0]]
  $region50: #{tpu_custom_call.1} parent=0
    _
  %s10 = ssub.s32 1, %s8
  %s11 = scalar_select 0, %s10, %s8
  $region1: #{tpu_custom_call.1} parent=0
    #allocation4 [shape = 'u8[8192]{0}', space=vmem, size = 0x2000, scoped, tag = 'input window, operand 0, single buffered']
    #allocation5 [shape = 's32[1]{0}', space=sflag, size = 0x4, scoped, tag = 'scoped memory for tpu_custom_call.1']
    #allocation6 [shape = 's32[1]{0}', space=sflag, size = 0x4, scoped, tag = 'scoped memory for tpu_custom_call.1']
    #allocation7 [shape = 'u8[16384]{0}', space=vmem, size = 0x4000, scoped, tag = 'input window, operand 1, single buffered']
    #allocation8 [shape = 's32[1]{0}', space=sflag, size = 0x4, scoped, tag = 'scoped memory for tpu_custom_call.1']
    #allocation9 [shape = 'u8[16384]{0}', space=vmem, size = 0x4000, scoped, tag = 'input window, operand 3, single buffered']
    #allocation10 [shape = 'u8[8192]{0}', space=vmem, size = 0x2000, scoped, tag = 'output window, operand 0, single buffered']
    #allocation11 [shape = 'u8[32768]{0}', space=vmem, size = 0x8000, scoped, tag = 'output window, operand 1, single buffered']
    #allocation12 [shape = 's32[1]{0}', space=sflag, size = 0x4, scoped, tag = 'scoped memory for tpu_custom_call.1']
    %12 = vsyncpa [#allocation5], 0
    %13 = vsyncpa [#allocation8], 0
    %14 = vsyncpa [#allocation6], 0
    %15 = vsyncpa [#allocation12], 0
    // Predicated region
    $region2: #{tpu_custom_call.1} parent=1 // pred_check
      _
    $region3: #{tpu_custom_call.1} parent=1 // pred_check_branch
      %17 = sbr.rel (0) target = $region5
    $region4: #{tpu_custom_call.1} parent=1 // pred_region
      %19 = vsyncadd [#allocation5], 0
      %s20 = sshll.u32 %s0, 4
      %s21 = int_to_ptr.hbm [resolvable:$true] %s20
      %s22 = sshll.u32 [#allocation4], 4
      %s23 = int_to_ptr.vmem [resolvable:$true] %s22
      %28 = dma.hbm_to_vmem [thread:$0]  %s21, 256, %s23, [#allocation5], 128, 128, 8
    $region5: #{tpu_custom_call.1} parent=1 // pred_fallthru
      _
    // Predicated region
    $region6: #{tpu_custom_call.1} parent=1 // pred_check
      _
    $region7: #{tpu_custom_call.1} parent=1 // pred_check_branch
      %30 = sbr.rel (0) target = $region9
    $region8: #{tpu_custom_call.1} parent=1 // pred_region
      %32 = vsyncadd [#allocation8], 0
      %s33 = sshll.u32 %s1, 4
      %s34 = int_to_ptr.hbm [resolvable:$true] %s33
      %s35 = sshll.u32 [#allocation7], 4
      %s36 = int_to_ptr.vmem [resolvable:$true] %s35
      %41 = dma.hbm_to_vmem [thread:$0]  %s34, 512, %s36, [#allocation8], 128, 128, 8
    $region9: #{tpu_custom_call.1} parent=1 // pred_fallthru
      _
    // Predicated region
    $region10: #{tpu_custom_call.1} parent=1 // pred_check
      _
    $region11: #{tpu_custom_call.1} parent=1 // pred_check_branch
      %43 = sbr.rel (0) target = $region13
    $region12: #{tpu_custom_call.1} parent=1 // pred_region
      _
    $region13: #{tpu_custom_call.1} parent=1 // pred_fallthru
      _
    // Predicated region
    $region14: #{tpu_custom_call.1} parent=1 // pred_check
      _
    $region15: #{tpu_custom_call.1} parent=1 // pred_check_branch
      %45 = sbr.rel (0) target = $region17
    $region16: #{tpu_custom_call.1} parent=1 // pred_region
      %47 = vsyncadd [#allocation8], 0
      %s48 = sshll.u32 %s3, 4
      %s49 = int_to_ptr.hbm [resolvable:$true] %s48
      %s50 = sshll.u32 [#allocation9], 4
      %s51 = int_to_ptr.vmem [resolvable:$true] %s50
      %56 = dma.hbm_to_vmem [thread:$0]  %s49, 512, %s51, [#allocation8], 128, 128, 8
    $region17: #{tpu_custom_call.1} parent=1 // pred_fallthru
      _
    // Predicated region
    $region18: #{tpu_custom_call.1} parent=1 // pred_check
      _
    $region19: #{tpu_custom_call.1} parent=1 // pred_check_branch
      %58 = sbr.rel (0) target = $region21
    $region20: #{tpu_custom_call.1} parent=1 // pred_region
      _
    $region21: #{tpu_custom_call.1} parent=1 // pred_fallthru
      _
    // Predicated region
    $region22: #{tpu_custom_call.1} parent=1 // pred_check
      _
    $region23: #{tpu_custom_call.1} parent=1 // pred_check_branch
      %60 = sbr.rel (0) target = $region25
    $region24: #{tpu_custom_call.1} parent=1 // pred_region
      %62 = dma.done [#allocation5], 256
    $region25: #{tpu_custom_call.1} parent=1 // pred_fallthru
      _
    // Predicated region
    $region26: #{tpu_custom_call.1} parent=1 // pred_check
      _
    $region27: #{tpu_custom_call.1} parent=1 // pred_check_branch
      %64 = sbr.rel (0) target = $region29
    $region28: #{tpu_custom_call.1} parent=1 // pred_region
      %66 = dma.done [#allocation8], 512
    $region29: #{tpu_custom_call.1} parent=1 // pred_fallthru
      _
    // Predicated region
    $region30: #{tpu_custom_call.1} parent=1 // pred_check
      _
    $region31: #{tpu_custom_call.1} parent=1 // pred_check_branch
      %68 = sbr.rel (0) target = $region33
    $region32: #{tpu_custom_call.1} parent=1 // pred_region
      %70 = dma.done [#allocation8], 512
    $region33: #{tpu_custom_call.1} parent=1 // pred_fallthru
      _
    %v71 = vld [vmem:[#allocation4] sm:$0xff]
    %v72 = vld [vmem:[#allocation4 + $0x8] sm:$0xff]
    %v73 = vld [vmem:[#allocation7] sm:$0xff]
    %v74 = vld [vmem:[#allocation7 + $0x8] sm:$0xff]
    %v75 = vld [vmem:[#allocation7 + $0x10] sm:$0xff]
    %v76 = vld [vmem:[#allocation7 + $0x18] sm:$0xff]
    %v77 = vld [vmem:[%s2] sm:$0x1]
    %v79 = vperm.slane %v77, 0
    %vm81 = vcmask 261120
    %v83 = vsel %vm81, %v71, 0
    %v86 = vsel %vm81, %v72, 0
    %88 = vmatpush.msra.mxu0 0.0
    %89 = vmatpush.msra.mxu0 0.0
    %90 = vmatpush.msra.mxu0 0.0
    %91 = vmatpush.msra.mxu0 0.0
    %92 = vmatpush.msra.mxu0 0.0
    %93 = vmatpush.msra.mxu0 0.0
    %94 = vmatpush.msra.mxu0 0.0
    %95 = vmatpush.msra.mxu0 0.0
    %96 = vmatpush.msra.mxu0 0.0
    %97 = vmatpush.msra.mxu0 0.0
    %98 = vmatpush.msra.mxu0 0.0
    %99 = vmatpush.msra.mxu0 0.0
    %100 = vmatpush.msra.mxu0 %v76
    %101 = vmatpush.msra.mxu0 %v75
    %102 = vmatpush.msra.mxu0 %v74
    %103 = vmatpush.msra.mxu0 %v73
    %104 = vmatmul.f32.gmra.mxu0 %v83
    %v105 = vpop.f32.mrf.mxu0
    %v106 = vadd.f32 %v79, %v105
    %107 = vmatmul.f32.gmra.mxu0 %v86
    %v108 = vpop.f32.mrf.mxu0
    %v109 = vadd.f32 %v79, %v108
    %110 = vdwg.mxu0
    %v111 = vmul.f32 %v106, 0.35355338
    %v112 = vmul.f32 %v109, 0.35355338
    %114 = vrot.lane.b32.xlu0 %v106, 96
    %v115 = vpop.permute.xlu0 %114
    %vm116 = vcmask 64512
    %v118 = vsel %vm116, %v111, 0
    %v120 = vsel %vm116, %v115, 0
    %122 = vmatpush.xpose.msra.mxu0 0.0
    %123 = vmatpush.xpose.msra.mxu0 0.0
    %124 = vmatpush.xpose.msra.mxu0 0.0
    %125 = vmatpush.xpose.msra.mxu0 0.0
    %126 = vmatpush.xpose.msra.mxu0 0.0
    %127 = vmatpush.xpose.msra.mxu0 0.0
    %128 = vmatpush.xpose.msra.mxu0 0.0
    %129 = vmatpush.xpose.msra.mxu0 0.0
    %130 = vmatpush.xpose.msra.mxu0 0.0
    %131 = vmatpush.xpose.msra.mxu0 0.0
    %132 = vmatpush.xpose.msra.mxu0 0.0
    %133 = vmatpush.xpose.msra.mxu0 0.0
    %134 = vmatpush.xpose.msra.mxu0 0.0
    %135 = vmatpush.xpose.msra.mxu0 0.0
    %136 = vmatpush.xpose.msra.mxu0 0.0
    %137 = vmatpush.xpose.msra.mxu0 %v120
    %138 = vmatmul.f32.gmra.mxu0 %v118
    %v139 = vpop.f32.mrf.mxu0
    %v140 = vadd.f32 0.0, %v139
    %141 = vdwg.mxu0
    %v142 = vsel %vm116, %v140, -inf
    %143 = vmax.xlane.f32.xlu0 %v142
    %v144 = vpop.xlane.xlu0 %143
    %v145 = vsub.f32 %v140, %v144
    %v146 = vmul.f32 %v145, 1.442695
    %v147 = vpow.pop %v146
    %v148 = vsel %vm116, %v147, 0.0
    %149 = vadd.xlane.f32.xlu0 %v148
    %v150 = vpop.xlane.xlu0 %149
    %v151 = vrcp.pop %v150
    %v152 = vmul.f32 %v147, %v151
    %153 = vst.msk [vmem:[#allocation3] sm:$0xff] %vm116, %v152
    %154 = vrot.lane.b32.xlu0 %v106, 64
    %v155 = vpop.permute.xlu0 %154
    %v158 = vsel %vm116, %v152, 0
    %160 = vmatpush.msra.mxu0 0.0
    %161 = vmatpush.msra.mxu0 0.0
    %162 = vmatpush.msra.mxu0 0.0
    %163 = vmatpush.msra.mxu0 0.0
    %164 = vmatpush.msra.mxu0 0.0
    %165 = vmatpush.msra.mxu0 0.0
    %166 = vmatpush.msra.mxu0 0.0
    %167 = vmatpush.msra.mxu0 0.0
    %168 = vmatpush.msra.mxu0 0.0
    %169 = vmatpush.msra.mxu0 0.0
    %170 = vmatpush.msra.mxu0 0.0
    %171 = vmatpush.msra.mxu0 0.0
    %172 = vmatpush.msra.mxu0 0.0
    %173 = vmatpush.msra.mxu0 0.0
    %174 = vmatpush.msra.mxu0 0.0
    %175 = vmatpush.msra.mxu0 %v155
    %176 = vmatmul.f32.gmra.mxu0 %v158
    %v177 = vpop.f32.mrf.mxu0
    %v178 = vadd.f32 0.0, %v177
    %179 = vdwg.mxu0
    %180 = vst.msk [vmem:[#allocation2] sm:$0xff] %vm116, %v178
    %181 = vrot.lane.b32.xlu0 %v111, 120
    %v182 = vpop.permute.xlu0 %181
    %183 = vrot.lane.b32.xlu0 %v106, 88
    %v184 = vpop.permute.xlu0 %183
    %v185 = vsel %vm116, %v182, 0
    %v187 = vsel %vm116, %v184, 0
    %189 = vmatpush.xpose.msra.mxu0 0.0
    %190 = vmatpush.xpose.msra.mxu0 0.0
    %191 = vmatpush.xpose.msra.mxu0 0.0
    %192 = vmatpush.xpose.msra.mxu0 0.0
    %193 = vmatpush.xpose.msra.mxu0 0.0
    %194 = vmatpush.xpose.msra.mxu0 0.0
    %195 = vmatpush.xpose.msra.mxu0 0.0
    %196 = vmatpush.xpose.msra.mxu0 0.0
    %197 = vmatpush.xpose.msra.mxu0 0.0
    %198 = vmatpush.xpose.msra.mxu0 0.0
    %199 = vmatpush.xpose.msra.mxu0 0.0
    %200 = vmatpush.xpose.msra.mxu0 0.0
    %201 = vmatpush.xpose.msra.mxu0 0.0
    %202 = vmatpush.xpose.msra.mxu0 0.0
    %203 = vmatpush.xpose.msra.mxu0 0.0
    %204 = vmatpush.xpose.msra.mxu0 %v187
    %205 = vmatmul.f32.gmra.mxu0 %v185
    %v206 = vpop.f32.mrf.mxu0
    %v207 = vadd.f32 0.0, %v206
    %208 = vdwg.mxu0
    %v209 = vsel %vm116, %v207, -inf
    %210 = vmax.xlane.f32.xlu0 %v209
    %v211 = vpop.xlane.xlu0 %210
    %v212 = vsub.f32 %v207, %v211
    %v213 = vmul.f32 %v212, 1.442695
    %v214 = vpow.pop %v213
    %v215 = vsel %vm116, %v214, 0.0
    %216 = vadd.xlane.f32.xlu0 %v215
    %v217 = vpop.xlane.xlu0 %216
    %v218 = vrcp.pop %v217
    %v219 = vmul.f32 %v214, %v218
    %s220 = scalar_lea.vmem [#allocation3], 8
    %221 = vst.msk [vmem:[%s220] sm:$0xff] %vm116, %v219
    %222 = vrot.lane.b32.xlu0 %v106, 56
    %v223 = vpop.permute.xlu0 %222
    %v226 = vsel %vm116, %v219, 0
    %228 = vmatpush.msra.mxu0 0.0
    %229 = vmatpush.msra.mxu0 0.0
    %230 = vmatpush.msra.mxu0 0.0
    %231 = vmatpush.msra.mxu0 0.0
    %232 = vmatpush.msra.mxu0 0.0
    %233 = vmatpush.msra.mxu0 0.0
    %234 = vmatpush.msra.mxu0 0.0
    %235 = vmatpush.msra.mxu0 0.0
    %236 = vmatpush.msra.mxu0 0.0
    %237 = vmatpush.msra.mxu0 0.0
    %238 = vmatpush.msra.mxu0 0.0
    %239 = vmatpush.msra.mxu0 0.0
    %240 = vmatpush.msra.mxu0 0.0
    %241 = vmatpush.msra.mxu0 0.0
    %242 = vmatpush.msra.mxu0 0.0
    %243 = vmatpush.msra.mxu0 %v223
    %244 = vmatmul.f32.gmra.mxu0 %v226
    %v245 = vpop.f32.mrf.mxu0
    %v246 = vadd.f32 0.0, %v245
    %247 = vdwg.mxu0
    %249 = vrot.lane.b32.xlu0 %v246, 8
    %v250 = vpop.permute.xlu0 %249
    %vm252 = vcmask 130112
    %253 = vst.msk [vmem:[#allocation2] sm:$0xff] %vm252, %v250
    %254 = vrot.lane.b32.xlu0 %v111, 112
    %v255 = vpop.permute.xlu0 %254
    %256 = vrot.lane.b32.xlu0 %v106, 80
    %v257 = vpop.permute.xlu0 %256
    %v258 = vsel %vm116, %v255, 0
    %v260 = vsel %vm116, %v257, 0
    %262 = vmatpush.xpose.msra.mxu0 0.0
    %263 = vmatpush.xpose.msra.mxu0 0.0
    %264 = vmatpush.xpose.msra.mxu0 0.0
    %265 = vmatpush.xpose.msra.mxu0 0.0
    %266 = vmatpush.xpose.msra.mxu0 0.0
    %267 = vmatpush.xpose.msra.mxu0 0.0
    %268 = vmatpush.xpose.msra.mxu0 0.0
    %269 = vmatpush.xpose.msra.mxu0 0.0
    %270 = vmatpush.xpose.msra.mxu0 0.0
    %271 = vmatpush.xpose.msra.mxu0 0.0
    %272 = vmatpush.xpose.msra.mxu0 0.0
    %273 = vmatpush.xpose.msra.mxu0 0.0
    %274 = vmatpush.xpose.msra.mxu0 0.0
    %275 = vmatpush.xpose.msra.mxu0 0.0
    %276 = vmatpush.xpose.msra.mxu0 0.0
    %277 = vmatpush.xpose.msra.mxu0 %v260
    %278 = vmatmul.f32.gmra.mxu0 %v258
    %v279 = vpop.f32.mrf.mxu0
    %v280 = vadd.f32 0.0, %v279
    %281 = vdwg.mxu0
    %v282 = vsel %vm116, %v280, -inf
    %283 = vmax.xlane.f32.xlu0 %v282
    %v284 = vpop.xlane.xlu0 %283
    %v285 = vsub.f32 %v280, %v284
    %v286 = vmul.f32 %v285, 1.442695
    %v287 = vpow.pop %v286
    %v288 = vsel %vm116, %v287, 0.0
    %289 = vadd.xlane.f32.xlu0 %v288
    %v290 = vpop.xlane.xlu0 %289
    %v291 = vrcp.pop %v290
    %v292 = vmul.f32 %v287, %v291
    %s293 = scalar_lea.vmem [#allocation3], 16
    %294 = vst.msk [vmem:[%s293] sm:$0xff] %vm116, %v292
    %295 = vrot.lane.b32.xlu0 %v106, 48
    %v296 = vpop.permute.xlu0 %295
    %v299 = vsel %vm116, %v292, 0
    %301 = vmatpush.msra.mxu0 0.0
    %302 = vmatpush.msra.mxu0 0.0
    %303 = vmatpush.msra.mxu0 0.0
    %304 = vmatpush.msra.mxu0 0.0
    %305 = vmatpush.msra.mxu0 0.0
    %306 = vmatpush.msra.mxu0 0.0
    %307 = vmatpush.msra.mxu0 0.0
    %308 = vmatpush.msra.mxu0 0.0
    %309 = vmatpush.msra.mxu0 0.0
    %310 = vmatpush.msra.mxu0 0.0
    %311 = vmatpush.msra.mxu0 0.0
    %312 = vmatpush.msra.mxu0 0.0
    %313 = vmatpush.msra.mxu0 0.0
    %314 = vmatpush.msra.mxu0 0.0
    %315 = vmatpush.msra.mxu0 0.0
    %316 = vmatpush.msra.mxu0 %v296
    %317 = vmatmul.f32.gmra.mxu0 %v299
    %v318 = vpop.f32.mrf.mxu0
    %v319 = vadd.f32 0.0, %v318
    %320 = vdwg.mxu0
    %322 = vrot.lane.b32.xlu0 %v319, 16
    %v323 = vpop.permute.xlu0 %322
    %vm325 = vcmask 195712
    %326 = vst.msk [vmem:[#allocation2] sm:$0xff] %vm325, %v323
    %327 = vrot.lane.b32.xlu0 %v111, 104
    %v328 = vpop.permute.xlu0 %327
    %329 = vrot.lane.b32.xlu0 %v106, 72
    %v330 = vpop.permute.xlu0 %329
    %v331 = vsel %vm116, %v328, 0
    %v333 = vsel %vm116, %v330, 0
    %335 = vmatpush.xpose.msra.mxu0 0.0
    %336 = vmatpush.xpose.msra.mxu0 0.0
    %337 = vmatpush.xpose.msra.mxu0 0.0
    %338 = vmatpush.xpose.msra.mxu0 0.0
    %339 = vmatpush.xpose.msra.mxu0 0.0
    %340 = vmatpush.xpose.msra.mxu0 0.0
    %341 = vmatpush.xpose.msra.mxu0 0.0
    %342 = vmatpush.xpose.msra.mxu0 0.0
    %343 = vmatpush.xpose.msra.mxu0 0.0
    %344 = vmatpush.xpose.msra.mxu0 0.0
    %345 = vmatpush.xpose.msra.mxu0 0.0
    %346 = vmatpush.xpose.msra.mxu0 0.0
    %347 = vmatpush.xpose.msra.mxu0 0.0
    %348 = vmatpush.xpose.msra.mxu0 0.0
    %349 = vmatpush.xpose.msra.mxu0 0.0
    %350 = vmatpush.xpose.msra.mxu0 %v333
    %351 = vmatmul.f32.gmra.mxu0 %v331
    %v352 = vpop.f32.mrf.mxu0
    %v353 = vadd.f32 0.0, %v352
    %354 = vdwg.mxu0
    %v355 = vsel %vm116, %v353, -inf
    %356 = vmax.xlane.f32.xlu0 %v355
    %v357 = vpop.xlane.xlu0 %356
    %v358 = vsub.f32 %v353, %v357
    %v359 = vmul.f32 %v358, 1.442695
    %v360 = vpow.pop %v359
    %v361 = vsel %vm116, %v360, 0.0
    %362 = vadd.xlane.f32.xlu0 %v361
    %v363 = vpop.xlane.xlu0 %362
    %v364 = vrcp.pop %v363
    %v365 = vmul.f32 %v360, %v364
    %s366 = scalar_lea.vmem [#allocation3], 24
    %367 = vst.msk [vmem:[%s366] sm:$0xff] %vm116, %v365
    %368 = vrot.lane.b32.xlu0 %v106, 40
    %v369 = vpop.permute.xlu0 %368
    %v372 = vsel %vm116, %v365, 0
    %374 = vmatpush.msra.mxu0 0.0
    %375 = vmatpush.msra.mxu0 0.0
    %376 = vmatpush.msra.mxu0 0.0
    %377 = vmatpush.msra.mxu0 0.0
    %378 = vmatpush.msra.mxu0 0.0
    %379 = vmatpush.msra.mxu0 0.0
    %380 = vmatpush.msra.mxu0 0.0
    %381 = vmatpush.msra.mxu0 0.0
    %382 = vmatpush.msra.mxu0 0.0
    %383 = vmatpush.msra.mxu0 0.0
    %384 = vmatpush.msra.mxu0 0.0
    %385 = vmatpush.msra.mxu0 0.0
    %386 = vmatpush.msra.mxu0 0.0
    %387 = vmatpush.msra.mxu0 0.0
    %388 = vmatpush.msra.mxu0 0.0
    %389 = vmatpush.msra.mxu0 %v369
    %390 = vmatmul.f32.gmra.mxu0 %v372
    %v391 = vpop.f32.mrf.mxu0
    %v392 = vadd.f32 0.0, %v391
    %393 = vdwg.mxu0
    %395 = vrot.lane.b32.xlu0 %v392, 24
    %v396 = vpop.permute.xlu0 %395
    %vm398 = vcmask 261312
    %399 = vst.msk [vmem:[#allocation2] sm:$0xff] %vm398, %v396
    %401 = vrot.lane.b32.xlu0 %v109, 96
    %v402 = vpop.permute.xlu0 %401
    %v404 = vsel %vm116, %v112, 0
    %v406 = vsel %vm116, %v402, 0
    %408 = vmatpush.xpose.msra.mxu0 0.0
    %409 = vmatpush.xpose.msra.mxu0 0.0
    %410 = vmatpush.xpose.msra.mxu0 0.0
    %411 = vmatpush.xpose.msra.mxu0 0.0
    %412 = vmatpush.xpose.msra.mxu0 0.0
    %413 = vmatpush.xpose.msra.mxu0 0.0
    %414 = vmatpush.xpose.msra.mxu0 0.0
    %415 = vmatpush.xpose.msra.mxu0 0.0
    %416 = vmatpush.xpose.msra.mxu0 0.0
    %417 = vmatpush.xpose.msra.mxu0 0.0
    %418 = vmatpush.xpose.msra.mxu0 0.0
    %419 = vmatpush.xpose.msra.mxu0 0.0
    %420 = vmatpush.xpose.msra.mxu0 0.0
    %421 = vmatpush.xpose.msra.mxu0 0.0
    %422 = vmatpush.xpose.msra.mxu0 0.0
    %423 = vmatpush.xpose.msra.mxu0 %v406
    %424 = vmatmul.f32.gmra.mxu0 %v404
    %v425 = vpop.f32.mrf.mxu0
    %v426 = vadd.f32 0.0, %v425
    %427 = vdwg.mxu0
    %v428 = vsel %vm116, %v426, -inf
    %429 = vmax.xlane.f32.xlu0 %v428
    %v430 = vpop.xlane.xlu0 %429
    %v431 = vsub.f32 %v426, %v430
    %v432 = vmul.f32 %v431, 1.442695
    %v433 = vpow.pop %v432
    %v434 = vsel %vm116, %v433, 0.0
    %435 = vadd.xlane.f32.xlu0 %v434
    %v436 = vpop.xlane.xlu0 %435
    %v437 = vrcp.pop %v436
    %v438 = vmul.f32 %v433, %v437
    %s439 = scalar_lea.vmem [#allocation3], 32
    %440 = vst.msk [vmem:[%s439] sm:$0xff] %vm116, %v438
    %441 = vrot.lane.b32.xlu0 %v109, 64
    %v442 = vpop.permute.xlu0 %441
    %v445 = vsel %vm116, %v438, 0
    %447 = vmatpush.msra.mxu0 0.0
    %448 = vmatpush.msra.mxu0 0.0
    %449 = vmatpush.msra.mxu0 0.0
    %450 = vmatpush.msra.mxu0 0.0
    %451 = vmatpush.msra.mxu0 0.0
    %452 = vmatpush.msra.mxu0 0.0
    %453 = vmatpush.msra.mxu0 0.0
    %454 = vmatpush.msra.mxu0 0.0
    %455 = vmatpush.msra.mxu0 0.0
    %456 = vmatpush.msra.mxu0 0.0
    %457 = vmatpush.msra.mxu0 0.0
    %458 = vmatpush.msra.mxu0 0.0
    %459 = vmatpush.msra.mxu0 0.0
    %460 = vmatpush.msra.mxu0 0.0
    %461 = vmatpush.msra.mxu0 0.0
    %462 = vmatpush.msra.mxu0 %v442
    %463 = vmatmul.f32.gmra.mxu0 %v445
    %v464 = vpop.f32.mrf.mxu0
    %v465 = vadd.f32 0.0, %v464
    %466 = vdwg.mxu0
    %467 = vst.msk [vmem:[#allocation2 + $0x8] sm:$0xff] %vm116, %v465
    %468 = vrot.lane.b32.xlu0 %v112, 120
    %v469 = vpop.permute.xlu0 %468
    %470 = vrot.lane.b32.xlu0 %v109, 88
    %v471 = vpop.permute.xlu0 %470
    %v472 = vsel %vm116, %v469, 0
    %v474 = vsel %vm116, %v471, 0
    %476 = vmatpush.xpose.msra.mxu0 0.0
    %477 = vmatpush.xpose.msra.mxu0 0.0
    %478 = vmatpush.xpose.msra.mxu0 0.0
    %479 = vmatpush.xpose.msra.mxu0 0.0
    %480 = vmatpush.xpose.msra.mxu0 0.0
    %481 = vmatpush.xpose.msra.mxu0 0.0
    %482 = vmatpush.xpose.msra.mxu0 0.0
    %483 = vmatpush.xpose.msra.mxu0 0.0
    %484 = vmatpush.xpose.msra.mxu0 0.0
    %485 = vmatpush.xpose.msra.mxu0 0.0
    %486 = vmatpush.xpose.msra.mxu0 0.0
    %487 = vmatpush.xpose.msra.mxu0 0.0
    %488 = vmatpush.xpose.msra.mxu0 0.0
    %489 = vmatpush.xpose.msra.mxu0 0.0
    %490 = vmatpush.xpose.msra.mxu0 0.0
    %491 = vmatpush.xpose.msra.mxu0 %v474
    %492 = vmatmul.f32.gmra.mxu0 %v472
    %v493 = vpop.f32.mrf.mxu0
    %v494 = vadd.f32 0.0, %v493
    %495 = vdwg.mxu0
    %v496 = vsel %vm116, %v494, -inf
    %497 = vmax.xlane.f32.xlu0 %v496
    %v498 = vpop.xlane.xlu0 %497
    %v499 = vsub.f32 %v494, %v498
    %v500 = vmul.f32 %v499, 1.442695
    %v501 = vpow.pop %v500
    %v502 = vsel %vm116, %v501, 0.0
    %503 = vadd.xlane.f32.xlu0 %v502
    %v504 = vpop.xlane.xlu0 %503
    %v505 = vrcp.pop %v504
    %v506 = vmul.f32 %v501, %v505
    %s507 = scalar_lea.vmem [#allocation3], 40
    %508 = vst.msk [vmem:[%s507] sm:$0xff] %vm116, %v506
    %509 = vrot.lane.b32.xlu0 %v109, 56
    %v510 = vpop.permute.xlu0 %509
    %v513 = vsel %vm116, %v506, 0
    %515 = vmatpush.msra.mxu0 0.0
    %516 = vmatpush.msra.mxu0 0.0
    %517 = vmatpush.msra.mxu0 0.0
    %518 = vmatpush.msra.mxu0 0.0
    %519 = vmatpush.msra.mxu0 0.0
    %520 = vmatpush.msra.mxu0 0.0
    %521 = vmatpush.msra.mxu0 0.0
    %522 = vmatpush.msra.mxu0 0.0
    %523 = vmatpush.msra.mxu0 0.0
    %524 = vmatpush.msra.mxu0 0.0
    %525 = vmatpush.msra.mxu0 0.0
    %526 = vmatpush.msra.mxu0 0.0
    %527 = vmatpush.msra.mxu0 0.0
    %528 = vmatpush.msra.mxu0 0.0
    %529 = vmatpush.msra.mxu0 0.0
    %530 = vmatpush.msra.mxu0 %v510
    %531 = vmatmul.f32.gmra.mxu0 %v513
    %v532 = vpop.f32.mrf.mxu0
    %v533 = vadd.f32 0.0, %v532
    %534 = vdwg.mxu0
    %536 = vrot.lane.b32.xlu0 %v533, 8
    %v537 = vpop.permute.xlu0 %536
    %539 = vst.msk [vmem:[#allocation2 + $0x8] sm:$0xff] %vm252, %v537
    %540 = vrot.lane.b32.xlu0 %v112, 112
    %v541 = vpop.permute.xlu0 %540
    %542 = vrot.lane.b32.xlu0 %v109, 80
    %v543 = vpop.permute.xlu0 %542
    %v544 = vsel %vm116, %v541, 0
    %v546 = vsel %vm116, %v543, 0
    %548 = vmatpush.xpose.msra.mxu0 0.0
    %549 = vmatpush.xpose.msra.mxu0 0.0
    %550 = vmatpush.xpose.msra.mxu0 0.0
    %551 = vmatpush.xpose.msra.mxu0 0.0
    %552 = vmatpush.xpose.msra.mxu0 0.0
    %553 = vmatpush.xpose.msra.mxu0 0.0
    %554 = vmatpush.xpose.msra.mxu0 0.0
    %555 = vmatpush.xpose.msra.mxu0 0.0
    %556 = vmatpush.xpose.msra.mxu0 0.0
    %557 = vmatpush.xpose.msra.mxu0 0.0
    %558 = vmatpush.xpose.msra.mxu0 0.0
    %559 = vmatpush.xpose.msra.mxu0 0.0
    %560 = vmatpush.xpose.msra.mxu0 0.0
    %561 = vmatpush.xpose.msra.mxu0 0.0
    %562 = vmatpush.xpose.msra.mxu0 0.0
    %563 = vmatpush.xpose.msra.mxu0 %v546
    %564 = vmatmul.f32.gmra.mxu0 %v544
    %v565 = vpop.f32.mrf.mxu0
    %v566 = vadd.f32 0.0, %v565
    %567 = vdwg.mxu0
    %v568 = vsel %vm116, %v566, -inf
    %569 = vmax.xlane.f32.xlu0 %v568
    %v570 = vpop.xlane.xlu0 %569
    %v571 = vsub.f32 %v566, %v570
    %v572 = vmul.f32 %v571, 1.442695
    %v573 = vpow.pop %v572
    %v574 = vsel %vm116, %v573, 0.0
    %575 = vadd.xlane.f32.xlu0 %v574
    %v576 = vpop.xlane.xlu0 %575
    %v577 = vrcp.pop %v576
    %v578 = vmul.f32 %v573, %v577
    %s579 = scalar_lea.vmem [#allocation3], 48
    %580 = vst.msk [vmem:[%s579] sm:$0xff] %vm116, %v578
    %581 = vrot.lane.b32.xlu0 %v109, 48
    %v582 = vpop.permute.xlu0 %581
    %v585 = vsel %vm116, %v578, 0
    %587 = vmatpush.msra.mxu0 0.0
    %588 = vmatpush.msra.mxu0 0.0
    %589 = vmatpush.msra.mxu0 0.0
    %590 = vmatpush.msra.mxu0 0.0
    %591 = vmatpush.msra.mxu0 0.0
    %592 = vmatpush.msra.mxu0 0.0
    %593 = vmatpush.msra.mxu0 0.0
    %594 = vmatpush.msra.mxu0 0.0
    %595 = vmatpush.msra.mxu0 0.0
    %596 = vmatpush.msra.mxu0 0.0
    %597 = vmatpush.msra.mxu0 0.0
    %598 = vmatpush.msra.mxu0 0.0
    %599 = vmatpush.msra.mxu0 0.0
    %600 = vmatpush.msra.mxu0 0.0
    %601 = vmatpush.msra.mxu0 0.0
    %602 = vmatpush.msra.mxu0 %v582
    %603 = vmatmul.f32.gmra.mxu0 %v585
    %v604 = vpop.f32.mrf.mxu0
    %v605 = vadd.f32 0.0, %v604
    %606 = vdwg.mxu0
    %608 = vrot.lane.b32.xlu0 %v605, 16
    %v609 = vpop.permute.xlu0 %608
    %611 = vst.msk [vmem:[#allocation2 + $0x8] sm:$0xff] %vm325, %v609
    %612 = vrot.lane.b32.xlu0 %v112, 104
    %v613 = vpop.permute.xlu0 %612
    %614 = vrot.lane.b32.xlu0 %v109, 72
    %v615 = vpop.permute.xlu0 %614
    %v616 = vsel %vm116, %v613, 0
    %v618 = vsel %vm116, %v615, 0
    %620 = vmatpush.xpose.msra.mxu0 0.0
    %621 = vmatpush.xpose.msra.mxu0 0.0
    %622 = vmatpush.xpose.msra.mxu0 0.0
    %623 = vmatpush.xpose.msra.mxu0 0.0
    %624 = vmatpush.xpose.msra.mxu0 0.0
    %625 = vmatpush.xpose.msra.mxu0 0.0
    %626 = vmatpush.xpose.msra.mxu0 0.0
    %627 = vmatpush.xpose.msra.mxu0 0.0
    %628 = vmatpush.xpose.msra.mxu0 0.0
    %629 = vmatpush.xpose.msra.mxu0 0.0
    %630 = vmatpush.xpose.msra.mxu0 0.0
    %631 = vmatpush.xpose.msra.mxu0 0.0
    %632 = vmatpush.xpose.msra.mxu0 0.0
    %633 = vmatpush.xpose.msra.mxu0 0.0
    %634 = vmatpush.xpose.msra.mxu0 0.0
    %635 = vmatpush.xpose.msra.mxu0 %v618
    %636 = vmatmul.f32.gmra.mxu0 %v616
    %v637 = vpop.f32.mrf.mxu0
    %v638 = vadd.f32 0.0, %v637
    %639 = vdwg.mxu0
    %v640 = vsel %vm116, %v638, -inf
    %641 = vmax.xlane.f32.xlu0 %v640
    %v642 = vpop.xlane.xlu0 %641
    %v643 = vsub.f32 %v638, %v642
    %v644 = vmul.f32 %v643, 1.442695
    %v645 = vpow.pop %v644
    %v646 = vsel %vm116, %v645, 0.0
    %647 = vadd.xlane.f32.xlu0 %v646
    %v648 = vpop.xlane.xlu0 %647
    %v649 = vrcp.pop %v648
    %v650 = vmul.f32 %v645, %v649
    %s651 = scalar_lea.vmem [#allocation3], 56
    %652 = vst.msk [vmem:[%s651] sm:$0xff] %vm116, %v650
    %653 = vrot.lane.b32.xlu0 %v109, 40
    %v654 = vpop.permute.xlu0 %653
    %v657 = vsel %vm116, %v650, 0
    %659 = vmatpush.msra.mxu0 0.0
    %660 = vmatpush.msra.mxu0 0.0
    %661 = vmatpush.msra.mxu0 0.0
    %662 = vmatpush.msra.mxu0 0.0
    %663 = vmatpush.msra.mxu0 0.0
    %664 = vmatpush.msra.mxu0 0.0
    %665 = vmatpush.msra.mxu0 0.0
    %666 = vmatpush.msra.mxu0 0.0
    %667 = vmatpush.msra.mxu0 0.0
    %668 = vmatpush.msra.mxu0 0.0
    %669 = vmatpush.msra.mxu0 0.0
    %670 = vmatpush.msra.mxu0 0.0
    %671 = vmatpush.msra.mxu0 0.0
    %672 = vmatpush.msra.mxu0 0.0
    %673 = vmatpush.msra.mxu0 0.0
    %674 = vmatpush.msra.mxu0 %v654
    %675 = vmatmul.f32.gmra.mxu0 %v657
    %v676 = vpop.f32.mrf.mxu0
    %v677 = vadd.f32 0.0, %v676
    %678 = vdwg.mxu0
    %680 = vrot.lane.b32.xlu0 %v677, 24
    %v681 = vpop.permute.xlu0 %680
    %683 = vst.msk [vmem:[#allocation2 + $0x8] sm:$0xff] %vm398, %v681
    %v684 = vld [vmem:[#allocation3] sm:$0xff]
    %v685 = vld [vmem:[#allocation3 + $0x8] sm:$0xff]
    %v686 = vld [vmem:[#allocation3 + $0x10] sm:$0xff]
    %v687 = vld [vmem:[#allocation3 + $0x18] sm:$0xff]
    %v688 = vld [vmem:[#allocation3 + $0x20] sm:$0xff]
    %v689 = vld [vmem:[#allocation3 + $0x28] sm:$0xff]
    %v690 = vld [vmem:[#allocation3 + $0x30] sm:$0xff]
    %v691 = vld [vmem:[#allocation3 + $0x38] sm:$0xff]
    %692 = vst.msk [vmem:[#allocation11] sm:$0xff] %vm116, %v684
    %693 = vst.msk [vmem:[#allocation11 + $0x8] sm:$0xff] %vm116, %v685
    %694 = vst.msk [vmem:[#allocation11 + $0x10] sm:$0xff] %vm116, %v686
    %695 = vst.msk [vmem:[#allocation11 + $0x18] sm:$0xff] %vm116, %v687
    %696 = vst.msk [vmem:[#allocation11 + $0x20] sm:$0xff] %vm116, %v688
    %697 = vst.msk [vmem:[#allocation11 + $0x28] sm:$0xff] %vm116, %v689
    %698 = vst.msk [vmem:[#allocation11 + $0x30] sm:$0xff] %vm116, %v690
    %699 = vst.msk [vmem:[#allocation11 + $0x38] sm:$0xff] %vm116, %v691
    %v700 = vld [vmem:[#allocation2] sm:$0xff]
    %v701 = vld [vmem:[#allocation2 + $0x8] sm:$0xff]
    %v702 = vld [vmem:[#allocation9] sm:$0xff]
    %v703 = vld [vmem:[#allocation9 + $0x8] sm:$0xff]
    %v704 = vld [vmem:[#allocation9 + $0x10] sm:$0xff]
    %v705 = vld [vmem:[#allocation9 + $0x18] sm:$0xff]
    %v706 = vld [vmem:[%s4] sm:$0x1]
    %v708 = vperm.slane %v706, 0
    %v711 = vsel %vm81, %v700, 0
    %v714 = vsel %vm81, %v701, 0
    %716 = vmatpush.msra.mxu0 0.0
    %717 = vmatpush.msra.mxu0 0.0
    %718 = vmatpush.msra.mxu0 0.0
    %719 = vmatpush.msra.mxu0 0.0
    %720 = vmatpush.msra.mxu0 0.0
    %721 = vmatpush.msra.mxu0 0.0
    %722 = vmatpush.msra.mxu0 0.0
    %723 = vmatpush.msra.mxu0 0.0
    %724 = vmatpush.msra.mxu0 0.0
    %725 = vmatpush.msra.mxu0 0.0
    %726 = vmatpush.msra.mxu0 0.0
    %727 = vmatpush.msra.mxu0 0.0
    %728 = vmatpush.msra.mxu0 %v705
    %729 = vmatpush.msra.mxu0 %v704
    %730 = vmatpush.msra.mxu0 %v703
    %731 = vmatpush.msra.mxu0 %v702
    %732 = vmatmul.f32.gmra.mxu0 %v711
    %v733 = vpop.f32.mrf.mxu0
    %v734 = vadd.f32 %v708, %v733
    %735 = vmatmul.f32.gmra.mxu0 %v714
    %v736 = vpop.f32.mrf.mxu0
    %v737 = vadd.f32 %v708, %v736
    %738 = vdwg.mxu0
    %739 = vst.msk [vmem:[#allocation10] sm:$0xff] %vm81, %v734
    %740 = vst.msk [vmem:[#allocation10 + $0x8] sm:$0xff] %vm81, %v737
    // Predicated region
    $region34: #{tpu_custom_call.1} parent=1 // pred_check
      _
    $region35: #{tpu_custom_call.1} parent=1 // pred_check_branch
      %742 = sbr.rel (0) target = $region37
    $region36: #{tpu_custom_call.1} parent=1 // pred_region
      %744 = vsyncadd [#allocation6], 0
      %s745 = sshll.u32 [#allocation10], 4
      %s746 = int_to_ptr.vmem [resolvable:$true] %s745
      %s747 = sshll.u32 %s5, 4
      %s748 = int_to_ptr.hbm [resolvable:$true] %s747
      %753 = dma.vmem_to_hbm [thread:$0]  %s746, 256, %s748, [#allocation6], 128, 128, 8
    $region37: #{tpu_custom_call.1} parent=1 // pred_fallthru
      _
    // Predicated region
    $region38: #{tpu_custom_call.1} parent=1 // pred_check
      _
    $region39: #{tpu_custom_call.1} parent=1 // pred_check_branch
      %755 = sbr.rel (0) target = $region41
    $region40: #{tpu_custom_call.1} parent=1 // pred_region
      %757 = vsyncadd [#allocation12], 0
      %s758 = sshll.u32 [#allocation11], 4
      %s759 = int_to_ptr.vmem [resolvable:$true] %s758
      %s760 = sshll.u32 %s6, 4
      %s761 = int_to_ptr.hbm [resolvable:$true] %s760
      %766 = dma.vmem_to_hbm [thread:$0]  %s759, 1024, %s761, [#allocation12], 128, 128, 8
    $region41: #{tpu_custom_call.1} parent=1 // pred_fallthru
      _
    // Predicated region
    $region42: #{tpu_custom_call.1} parent=1 // pred_check
      _
    $region43: #{tpu_custom_call.1} parent=1 // pred_check_branch
      %768 = sbr.rel (0) target = $region45
    $region44: #{tpu_custom_call.1} parent=1 // pred_region
      %770 = dma.done [#allocation6], 256
    $region45: #{tpu_custom_call.1} parent=1 // pred_fallthru
      _
    // Predicated region
    $region46: #{tpu_custom_call.1} parent=1 // pred_check
      _
    $region47: #{tpu_custom_call.1} parent=1 // pred_check_branch
      %772 = sbr.rel (0) target = $region49
    $region48: #{tpu_custom_call.1} parent=1 // pred_region
      %774 = dma.done [#allocation12], 1024
    $region49: #{tpu_custom_call.1} parent=1 // pred_fallthru
      _
    %775 = vsyncpa [#allocation5], 1
    %776 = vsyncpa [#allocation8], 1
    %777 = vsyncpa [#allocation6], 1
    %778 = vsyncpa [#allocation12], 1

</llo_original>
